<compile_context>
chip_gen: v6e
topology: v6e:2x2x1
jax: 0.10.0
libtpu: 0.0.40
codegen_flags: <defaults>
</compile_context>

<pallas_src>
import jax
import jax.numpy as jnp
from jax.experimental import pallas as pl
from jax.experimental.pallas import tpu as pltpu

HIDDEN = 768        # BERT hidden size (matches nn.Linear(768, 2))
NUM_CLASSES = 2
LANE = 128          # class dim padded to one full lane width (keep at 128)
NEG_MASK = -1e30    # baked into padded bias lanes; exp underflows to exactly 0


def cls_head_kernel(x_ref, w_ref, b_ref, o_ref):
    # x_ref: [Bt, HIDDEN]   CLS-token activations (f32 or bf16)
    # w_ref: [HIDDEN, LANE] Linear weight, zero-padded past NUM_CLASSES (x dtype)
    # b_ref: [1, LANE]      f32 bias, NEG_MASK past NUM_CLASSES (mask baked in)
    # o_ref: [Bt, LANE]     f32 softmax probs (junk past NUM_CLASSES sliced off)
    logits = jnp.dot(x_ref[...], w_ref[...],
                     preferred_element_type=jnp.float32) + b_ref[...]
    # Numerically-stable softmax over the class (lane) axis == torch softmax(dim=1).
    m = jnp.max(logits, axis=-1, keepdims=True)
    e = jnp.exp(logits - m)            # padded lanes: exp(-1e30 - m) == 0
    s = jnp.sum(e, axis=-1, keepdims=True)
    o_ref[...] = e / s


def make_model_forward(fc_weight, fc_bias, activation_dtype=jnp.float32,
                       bt_max=512):
    """Builds the forward fn; parameter padding is hoisted (done once here).

    fc_weight: [NUM_CLASSES, HIDDEN]  (PyTorch nn.Linear layout)
    fc_bias:   [NUM_CLASSES]
    activation_dtype: dtype of the encoder's last_hidden_state (f32 or bf16)
    bt_max: batch tile cap; 512 keeps double-buffered (Bt,768) input blocks
            far below v7x's 64 MiB VMEM while giving good HBM pipelining.
    """
    # nn.Linear computes x @ W.T + b ; pre-transpose + zero-pad classes to LANE.
    w_pad = (jnp.zeros((HIDDEN, LANE), activation_dtype)
             .at[:, :NUM_CLASSES].set(fc_weight.T.astype(activation_dtype)))
    b_pad = (jnp.full((1, LANE), NEG_MASK, jnp.float32)
             .at[:, :NUM_CLASSES].set(fc_bias.astype(jnp.float32)))

    def forward(last_hidden_state):
        B, S, H = last_hidden_state.shape
        assert H == HIDDEN
        assert last_hidden_state.dtype == activation_dtype
        # Collapse (S, H) -> S*H: contiguous, metadata-only reshape. The input
        # BlockSpec then reads only columns [0, HIDDEN) of each row, i.e. the
        # CLS token -- the seq-0 gather is fused into the kernel's input DMA.
        x2d = last_hidden_state.reshape(B, S * H)

        # Single block when B is small (block == full dim is always legal);
        # otherwise tile the batch (Bt multiple of 8; partial last block is
        # masked by Pallas on the output write).
        Bt = B if B <= bt_max else bt_max

        out = pl.pallas_call(
            cls_head_kernel,
            out_shape=jax.ShapeDtypeStruct((B, LANE), jnp.float32),
            grid=(pl.cdiv(B, Bt),),
            in_specs=[
                pl.BlockSpec((Bt, HIDDEN), lambda i: (i, 0)),    # CLS rows only
                pl.BlockSpec((HIDDEN, LANE), lambda i: (0, 0)),  # resident weight
                pl.BlockSpec((1, LANE), lambda i: (0, 0)),       # resident bias
            ],
            out_specs=pl.BlockSpec((Bt, LANE), lambda i: (i, 0)),
            compiler_params=pltpu.CompilerParams(
                dimension_semantics=("parallel",)),  # 2-TC sharding on v7x
        )(x2d, w_pad, b_pad)

        return out[:, :NUM_CLASSES]   # cheap lazy narrow slice at the consumer

    return jax.jit(forward)


if __name__ == "__main__":
    key = jax.random.PRNGKey(0)
    k_hidden, k_w, k_b = jax.random.split(key, 3)

    B, S = 2, 8  # small batch / seq; hidden must stay 768 per the module

    # Synthetic BERT output (stand-in for pretrained(...).last_hidden_state).
    last_hidden_state = jax.random.normal(k_hidden, (B, S, HIDDEN), jnp.float32)

    # Deterministic init of the fc = nn.Linear(768, 2) parameters.
    bound = 1.0 / (HIDDEN ** 0.5)
    fc_weight = jax.random.uniform(k_w, (NUM_CLASSES, HIDDEN), jnp.float32,
                                   minval=-bound, maxval=bound)
    fc_bias = jax.random.uniform(k_b, (NUM_CLASSES,), jnp.float32,
                                 minval=-bound, maxval=bound)

    # ---- f32 activation path: strict check vs pure-JAX reference ----------
    fwd_f32 = make_model_forward(fc_weight, fc_bias, jnp.float32)
    probs = jax.block_until_ready(fwd_f32(last_hidden_state))
    ref = jax.nn.softmax(last_hidden_state[:, 0, :] @ fc_weight.T + fc_bias, axis=1)
    assert probs.shape == (B, NUM_CLASSES)
    assert jnp.allclose(probs, ref, atol=1e-5), "f32 mismatch vs reference"
    assert jnp.allclose(jnp.sum(probs, axis=1), 1.0, atol=1e-5)

    # ---- bf16 activation path (encoder emitting bf16): loose check --------
    lhs_bf16 = last_hidden_state.astype(jnp.bfloat16)
    fwd_bf16 = make_model_forward(fc_weight, fc_bias, jnp.bfloat16)
    probs_bf16 = jax.block_until_ready(fwd_bf16(lhs_bf16))
    x_r = lhs_bf16[:, 0, :].astype(jnp.float32)
    w_r = fc_weight.astype(jnp.bfloat16).astype(jnp.float32)
    ref_bf16 = jax.nn.softmax(x_r @ w_r.T + fc_bias, axis=1)
    assert probs_bf16.shape == (B, NUM_CLASSES)
    assert jnp.allclose(probs_bf16, ref_bf16, atol=2e-2), "bf16 mismatch vs reference"
    assert jnp.allclose(jnp.sum(probs_bf16, axis=1), 1.0, atol=1e-3)

    print("KERNEL_OK")
</pallas_src>

<mosaic_0001>
module attributes {stable_mosaic.version = 11 : i64} {
  func.func @cls_head_kernel(%arg0: i32, %arg1: memref<2x768xf32, #tpu.memory_space<vmem>>, %arg2: memref<768x128xf32, #tpu.memory_space<vmem>>, %arg3: memref<1x128xf32, #tpu.memory_space<vmem>>, %arg4: memref<2x128xf32, #tpu.memory_space<vmem>>) attributes {dimension_semantics = [#tpu.dimension_semantics<parallel>], iteration_bounds = array<i64: 1>, scalar_prefetch = 0 : i64, scratch_operands = 0 : i64, tpu.core_type = #tpu.core_type<tc>, window_params = [{transform_indices = @transform_0, window_bounds = array<i64: 2, 768>}, {pipeline_mode = #tpu.pipeline_mode<synchronous>, transform_indices = @transform_1, window_bounds = array<i64: 768, 128>}, {pipeline_mode = #tpu.pipeline_mode<synchronous>, transform_indices = @transform_2, window_bounds = array<i64: 1, 128>}, {transform_indices = @transform_3, window_bounds = array<i64: 2, 128>}]} {
    %c0 = arith.constant 0 : index
    %c0_0 = arith.constant 0 : index
    %0 = vector.load %arg1[%c0, %c0_0] : memref<2x768xf32, #tpu.memory_space<vmem>>, vector<2x768xf32>
    %c0_1 = arith.constant 0 : index
    %c0_2 = arith.constant 0 : index
    %1 = vector.load %arg2[%c0_1, %c0_2] : memref<768x128xf32, #tpu.memory_space<vmem>>, vector<768x128xf32>
    %cst = arith.constant dense<0.000000e+00> : vector<2x128xf32>
    %2 = tpu.matmul %0, %1, %cst {dimension_numbers = #tpu.dot_dimension_numbers<[1], [0], [0], [1], [0, 0, 1, 1], [], []>} : vector<2x768xf32>, vector<768x128xf32>, vector<2x128xf32> -> vector<2x128xf32>
    %c0_3 = arith.constant 0 : index
    %c0_4 = arith.constant 0 : index
    %3 = vector.load %arg3[%c0_3, %c0_4] : memref<1x128xf32, #tpu.memory_space<vmem>>, vector<1x128xf32>
    %4 = vector.broadcast %3 : vector<1x128xf32> to vector<2x128xf32>
    %5 = arith.addf %2, %4 : vector<2x128xf32>
    %cst_5 = arith.constant dense<0xFF800000> : vector<2xf32>
    %6 = vector.multi_reduction <maximumf>, %5, %cst_5 [1] : vector<2x128xf32> to vector<2xf32>
    %7 = vector.shape_cast %6 : vector<2xf32> to vector<2x1xf32>
    %8 = vector.broadcast %7 : vector<2x1xf32> to vector<2x128xf32>
    %9 = arith.subf %5, %8 : vector<2x128xf32>
    %10 = math.exp %9 : vector<2x128xf32>
    %cst_6 = arith.constant dense<0.000000e+00> : vector<2xf32>
    %11 = vector.multi_reduction <add>, %10, %cst_6 [1] : vector<2x128xf32> to vector<2xf32>
    %12 = vector.shape_cast %11 : vector<2xf32> to vector<2x1xf32>
    %13 = vector.broadcast %12 : vector<2x1xf32> to vector<2x128xf32>
    %14 = arith.divf %10, %13 : vector<2x128xf32>
    %c0_7 = arith.constant 0 : index
    %c0_8 = arith.constant 0 : index
    %15 = vector.load %arg4[%c0_7, %c0_8] : memref<2x128xf32, #tpu.memory_space<vmem>>, vector<2x128xf32>
    tpu.vector_store %arg4[%c0_7, %c0_8], %14 {strides = array<i32>} : memref<2x128xf32, #tpu.memory_space<vmem>>, vector<2x128xf32>,
    return
  }
  func.func @transform_0(%arg0: i32) -> (i32, i32) {
    %c0_i32 = arith.constant 0 : i32
    %c0_i32_0 = arith.constant 0 : i32
    return %arg0, %c0_i32 : i32, i32
  }
  func.func @transform_1(%arg0: i32) -> (i32, i32) {
    %c0_i32 = arith.constant 0 : i32
    %c0_i32_0 = arith.constant 0 : i32
    %c0_i32_1 = arith.constant 0 : i32
    return %c0_i32, %c0_i32_0 : i32, i32
  }
  func.func @transform_2(%arg0: i32) -> (i32, i32) {
    %c0_i32 = arith.constant 0 : i32
    %c0_i32_0 = arith.constant 0 : i32
    %c0_i32_1 = arith.constant 0 : i32
    return %c0_i32, %c0_i32_0 : i32, i32
  }
  func.func @transform_3(%arg0: i32) -> (i32, i32) {
    %c0_i32 = arith.constant 0 : i32
    %c0_i32_0 = arith.constant 0 : i32
    return %arg0, %c0_i32 : i32, i32
  }
}

</mosaic_0001>

<llo_original>
// kernel: forward.1
$region0: #{forward.1}
  #allocation0 [shape = 'u32[]', space=smem, size = 0x4, offset = 0x4, fixed_abs, tag = 'smem constant byte address 0x4 - core index']
  #allocation1 [shape = 'u32[144,128]{1,0:T(1,128)}', space=vmem, size = 0x12000, scoped, tag = 'internal scratch']
  %s0 = inlined_call_operand.vmem [shape: f32[2,6144], index: 0, kind: input, shape index: {}]
  %s1 = inlined_call_operand.hbm [shape: f32[768,128], index: 1, kind: input, shape index: {}]
  %s2 = inlined_call_operand.vmem [shape: f32[1,128], index: 2, kind: input, shape index: {}]
  %s3 = inlined_call_operand.hbm [shape: f32[2,128], index: 3, kind: output, shape index: {}]
  %s4 = sld [smem:[#allocation0]]
  $region26: #{forward.1} parent=0
    _
  %s6 = ssub.s32 1, %s4
  %s7 = scalar_select 0, %s6, %s4
  $region1: #{forward.1} parent=0
    #allocation2 [shape = 'u8[393216]{0}', space=vmem, size = 0x60000, scoped, tag = 'input window, operand 1, single buffered']
    #allocation3 [shape = 's32[1]{0}', space=sflag, size = 0x4, scoped, tag = 'scoped memory for forward.1']
    #allocation4 [shape = 's32[1]{0}', space=sflag, size = 0x4, scoped, tag = 'scoped memory for forward.1']
    #allocation5 [shape = 'u8[1024]{0}', space=vmem, size = 0x400, scoped, tag = 'output window, operand 0, single buffered']
    %8 = vsyncpa [#allocation3], 0
    %9 = vsyncpa [#allocation4], 0
    // Predicated region
    $region2: #{forward.1} parent=1 // pred_check
      _
    $region3: #{forward.1} parent=1 // pred_check_branch
      %11 = sbr.rel (0) target = $region5
    $region4: #{forward.1} parent=1 // pred_region
      _
    $region5: #{forward.1} parent=1 // pred_fallthru
      _
    // Predicated region
    $region6: #{forward.1} parent=1 // pred_check
      _
    $region7: #{forward.1} parent=1 // pred_check_branch
      %13 = sbr.rel (0) target = $region9
    $region8: #{forward.1} parent=1 // pred_region
      %s15 = ssub.s32 12288, 12288
      %16 = vsyncadd [#allocation3], %s15
      %s17 = sshll.u32 [#allocation2], 4
      %s18 = int_to_ptr.vmem [resolvable:$true] %s17
      %23 = dma.hbm_to_vmem [thread:$0]  %s1, 12288, %s18, [#allocation3], 128, 128, 8
    $region9: #{forward.1} parent=1 // pred_fallthru
      _
    // Predicated region
    $region10: #{forward.1} parent=1 // pred_check
      _
    $region11: #{forward.1} parent=1 // pred_check_branch
      %25 = sbr.rel (0) target = $region13
    $region12: #{forward.1} parent=1 // pred_region
      _
    $region13: #{forward.1} parent=1 // pred_fallthru
      _
    // Predicated region
    $region14: #{forward.1} parent=1 // pred_check
      _
    $region15: #{forward.1} parent=1 // pred_check_branch
      %27 = sbr.rel (0) target = $region17
    $region16: #{forward.1} parent=1 // pred_region
      %28 = dma.done [#allocation3], 12288
    $region17: #{forward.1} parent=1 // pred_fallthru
      _
    %v29 = vld [vmem:[%s0] sm:$0xff]
    %v30 = vld [vmem:[%s0 + $0x8] sm:$0xf]
    %v31 = vld [vmem:[#allocation2] sm:$0xff]
    %v32 = vld [vmem:[#allocation2 + $0x8] sm:$0xff]
    %v33 = vld [vmem:[#allocation2 + $0x10] sm:$0xff]
    %v34 = vld [vmem:[#allocation2 + $0x18] sm:$0xff]
    %v35 = vld [vmem:[#allocation2 + $0x20] sm:$0xff]
    %v36 = vld [vmem:[#allocation2 + $0x28] sm:$0xff]
    %v37 = vld [vmem:[#allocation2 + $0x30] sm:$0xff]
    %v38 = vld [vmem:[#allocation2 + $0x38] sm:$0xff]
    %v39 = vld [vmem:[#allocation2 + $0x40] sm:$0xff]
    %v40 = vld [vmem:[#allocation2 + $0x48] sm:$0xff]
    %v41 = vld [vmem:[#allocation2 + $0x50] sm:$0xff]
    %v42 = vld [vmem:[#allocation2 + $0x58] sm:$0xff]
    %v43 = vld [vmem:[#allocation2 + $0x60] sm:$0xff]
    %v44 = vld [vmem:[#allocation2 + $0x68] sm:$0xff]
    %v45 = vld [vmem:[#allocation2 + $0x70] sm:$0xff]
    %v46 = vld [vmem:[#allocation2 + $0x78] sm:$0xff]
    %v47 = vld [vmem:[#allocation2 + $0x80] sm:$0xff]
    %v48 = vld [vmem:[#allocation2 + $0x88] sm:$0xff]
    %v49 = vld [vmem:[#allocation2 + $0x90] sm:$0xff]
    %v50 = vld [vmem:[#allocation2 + $0x98] sm:$0xff]
    %v51 = vld [vmem:[#allocation2 + $0xa0] sm:$0xff]
    %v52 = vld [vmem:[#allocation2 + $0xa8] sm:$0xff]
    %v53 = vld [vmem:[#allocation2 + $0xb0] sm:$0xff]
    %v54 = vld [vmem:[#allocation2 + $0xb8] sm:$0xff]
    %v55 = vld [vmem:[#allocation2 + $0xc0] sm:$0xff]
    %v56 = vld [vmem:[#allocation2 + $0xc8] sm:$0xff]
    %v57 = vld [vmem:[#allocation2 + $0xd0] sm:$0xff]
    %v58 = vld [vmem:[#allocation2 + $0xd8] sm:$0xff]
    %v59 = vld [vmem:[#allocation2 + $0xe0] sm:$0xff]
    %v60 = vld [vmem:[#allocation2 + $0xe8] sm:$0xff]
    %v61 = vld [vmem:[#allocation2 + $0xf0] sm:$0xff]
    %v62 = vld [vmem:[#allocation2 + $0xf8] sm:$0xff]
    %v63 = vld [vmem:[#allocation2 + $0x100] sm:$0xff]
    %v64 = vld [vmem:[#allocation2 + $0x108] sm:$0xff]
    %v65 = vld [vmem:[#allocation2 + $0x110] sm:$0xff]
    %v66 = vld [vmem:[#allocation2 + $0x118] sm:$0xff]
    %v67 = vld [vmem:[#allocation2 + $0x120] sm:$0xff]
    %v68 = vld [vmem:[#allocation2 + $0x128] sm:$0xff]
    %v69 = vld [vmem:[#allocation2 + $0x130] sm:$0xff]
    %v70 = vld [vmem:[#allocation2 + $0x138] sm:$0xff]
    %v71 = vld [vmem:[#allocation2 + $0x140] sm:$0xff]
    %v72 = vld [vmem:[#allocation2 + $0x148] sm:$0xff]
    %v73 = vld [vmem:[#allocation2 + $0x150] sm:$0xff]
    %v74 = vld [vmem:[#allocation2 + $0x158] sm:$0xff]
    %v75 = vld [vmem:[#allocation2 + $0x160] sm:$0xff]
    %v76 = vld [vmem:[#allocation2 + $0x168] sm:$0xff]
    %v77 = vld [vmem:[#allocation2 + $0x170] sm:$0xff]
    %v78 = vld [vmem:[#allocation2 + $0x178] sm:$0xff]
    %v79 = vld [vmem:[#allocation2 + $0x180] sm:$0xff]
    %v80 = vld [vmem:[#allocation2 + $0x188] sm:$0xff]
    %v81 = vld [vmem:[#allocation2 + $0x190] sm:$0xff]
    %v82 = vld [vmem:[#allocation2 + $0x198] sm:$0xff]
    %v83 = vld [vmem:[#allocation2 + $0x1a0] sm:$0xff]
    %v84 = vld [vmem:[#allocation2 + $0x1a8] sm:$0xff]
    %v85 = vld [vmem:[#allocation2 + $0x1b0] sm:$0xff]
    %v86 = vld [vmem:[#allocation2 + $0x1b8] sm:$0xff]
    %v87 = vld [vmem:[#allocation2 + $0x1c0] sm:$0xff]
    %v88 = vld [vmem:[#allocation2 + $0x1c8] sm:$0xff]
    %v89 = vld [vmem:[#allocation2 + $0x1d0] sm:$0xff]
    %v90 = vld [vmem:[#allocation2 + $0x1d8] sm:$0xff]
    %v91 = vld [vmem:[#allocation2 + $0x1e0] sm:$0xff]
    %v92 = vld [vmem:[#allocation2 + $0x1e8] sm:$0xff]
    %v93 = vld [vmem:[#allocation2 + $0x1f0] sm:$0xff]
    %v94 = vld [vmem:[#allocation2 + $0x1f8] sm:$0xff]
    %v95 = vld [vmem:[#allocation2 + $0x200] sm:$0xff]
    %v96 = vld [vmem:[#allocation2 + $0x208] sm:$0xff]
    %v97 = vld [vmem:[#allocation2 + $0x210] sm:$0xff]
    %v98 = vld [vmem:[#allocation2 + $0x218] sm:$0xff]
    %v99 = vld [vmem:[#allocation2 + $0x220] sm:$0xff]
    %v100 = vld [vmem:[#allocation2 + $0x228] sm:$0xff]
    %v101 = vld [vmem:[#allocation2 + $0x230] sm:$0xff]
    %v102 = vld [vmem:[#allocation2 + $0x238] sm:$0xff]
    %v103 = vld [vmem:[#allocation2 + $0x240] sm:$0xff]
    %v104 = vld [vmem:[#allocation2 + $0x248] sm:$0xff]
    %v105 = vld [vmem:[#allocation2 + $0x250] sm:$0xff]
    %v106 = vld [vmem:[#allocation2 + $0x258] sm:$0xff]
    %v107 = vld [vmem:[#allocation2 + $0x260] sm:$0xff]
    %v108 = vld [vmem:[#allocation2 + $0x268] sm:$0xff]
    %v109 = vld [vmem:[#allocation2 + $0x270] sm:$0xff]
    %v110 = vld [vmem:[#allocation2 + $0x278] sm:$0xff]
    %v111 = vld [vmem:[#allocation2 + $0x280] sm:$0xff]
    %v112 = vld [vmem:[#allocation2 + $0x288] sm:$0xff]
    %v113 = vld [vmem:[#allocation2 + $0x290] sm:$0xff]
    %v114 = vld [vmem:[#allocation2 + $0x298] sm:$0xff]
    %v115 = vld [vmem:[#allocation2 + $0x2a0] sm:$0xff]
    %v116 = vld [vmem:[#allocation2 + $0x2a8] sm:$0xff]
    %v117 = vld [vmem:[#allocation2 + $0x2b0] sm:$0xff]
    %v118 = vld [vmem:[#allocation2 + $0x2b8] sm:$0xff]
    %v119 = vld [vmem:[#allocation2 + $0x2c0] sm:$0xff]
    %v120 = vld [vmem:[#allocation2 + $0x2c8] sm:$0xff]
    %v121 = vld [vmem:[#allocation2 + $0x2d0] sm:$0xff]
    %v122 = vld [vmem:[#allocation2 + $0x2d8] sm:$0xff]
    %v123 = vld [vmem:[#allocation2 + $0x2e0] sm:$0xff]
    %v124 = vld [vmem:[#allocation2 + $0x2e8] sm:$0xff]
    %v125 = vld [vmem:[#allocation2 + $0x2f0] sm:$0xff]
    %v126 = vld [vmem:[#allocation2 + $0x2f8] sm:$0xff]
    %v127 = vld [vmem:[%s2] sm:$0x1]
    %v129 = vlaneseq
    %v130 = vshrl.u32 %v129, 7
    %v131 = vsub.s32 0, %v130
    %v132 = vrot.slane %v127, %v131
    %v136 = vcombine.high %v29, %v29
    %v138 = vunpack.c.l.s4 1983009808
    %v139 = vunpack.c.0.s8 %v138
    %v140 = vlaneseq
    %v141 = vshrl.u32 %v140, 7
    %v142 = vsub.s32 %v139, %v141
    %v143 = vrot.slane %v29, %v142
    %v145 = vunpack.c.l.s4 1983009808
    %v146 = vunpack.c.0.s8 %v145
    %v147 = vlaneseq
    %v148 = vshrl.u32 %v147, 7
    %v149 = vsub.s32 %v146, %v148
    %v150 = vrot.slane %v136, %v149
    %v151 = vcombine.high %v143, %v143
    %v152 = vcombine.high %v150, %v150
    %v154 = vunpack.c.l.s4 1983009808
    %v155 = vunpack.c.0.s8 %v154
    %v156 = vlaneseq
    %v157 = vshrl.u32 %v156, 7
    %v158 = vsub.s32 %v155, %v157
    %v159 = vrot.slane %v30, %v158
    %v160 = vcombine.high %v159, %v159
    %167 = vmatprep.subr.mxu0 0.0
    %168 = vmatpush1.msra.mxu0 %v46
    %169 = vmatprep.subr.mxu0 0.0
    %170 = vmatpush1.msra.mxu0 %v45
    %171 = vmatprep.subr.mxu0 0.0
    %172 = vmatpush1.msra.mxu0 %v44
    %173 = vmatprep.subr.mxu0 0.0
    %174 = vmatpush1.msra.mxu0 %v43
    %175 = vmatprep.subr.mxu0 0.0
    %176 = vmatpush1.msra.mxu0 %v42
    %177 = vmatprep.subr.mxu0 0.0
    %178 = vmatpush1.msra.mxu0 %v41
    %179 = vmatprep.subr.mxu0 0.0
    %180 = vmatpush1.msra.mxu0 %v40
    %181 = vmatprep.subr.mxu0 0.0
    %182 = vmatpush1.msra.mxu0 %v39
    %183 = vmatprep.subr.mxu0 0.0
    %184 = vmatpush1.msra.mxu0 %v38
    %185 = vmatprep.subr.mxu0 0.0
    %186 = vmatpush1.msra.mxu0 %v37
    %187 = vmatprep.subr.mxu0 0.0
    %188 = vmatpush1.msra.mxu0 %v36
    %189 = vmatprep.subr.mxu0 0.0
    %190 = vmatpush1.msra.mxu0 %v35
    %191 = vmatprep.subr.mxu0 0.0
    %192 = vmatpush1.msra.mxu0 %v34
    %193 = vmatprep.subr.mxu0 0.0
    %194 = vmatpush1.msra.mxu0 %v33
    %195 = vmatprep.subr.mxu0 0.0
    %196 = vmatpush1.msra.mxu0 %v32
    %197 = vmatprep.subr.mxu0 0.0
    %198 = vmatpush1.msra.mxu0 %v31
    %199 = vmatprep.subr.mxu0 0.0
    %200 = vmatpush2.msra.mxu0 %v62
    %201 = vmatprep.subr.mxu0 0.0
    %202 = vmatpush2.msra.mxu0 %v61
    %203 = vmatprep.subr.mxu0 0.0
    %204 = vmatpush2.msra.mxu0 %v60
    %205 = vmatprep.subr.mxu0 0.0
    %206 = vmatpush2.msra.mxu0 %v59
    %207 = vmatprep.subr.mxu0 0.0
    %208 = vmatpush2.msra.mxu0 %v58
    %209 = vmatprep.subr.mxu0 0.0
    %210 = vmatpush2.msra.mxu0 %v57
    %211 = vmatprep.subr.mxu0 0.0
    %212 = vmatpush2.msra.mxu0 %v56
    %213 = vmatprep.subr.mxu0 0.0
    %214 = vmatpush2.msra.mxu0 %v55
    %215 = vmatprep.subr.mxu0 0.0
    %216 = vmatpush2.msra.mxu0 %v54
    %217 = vmatprep.subr.mxu0 0.0
    %218 = vmatpush2.msra.mxu0 %v53
    %219 = vmatprep.subr.mxu0 0.0
    %220 = vmatpush2.msra.mxu0 %v52
    %221 = vmatprep.subr.mxu0 0.0
    %222 = vmatpush2.msra.mxu0 %v51
    %223 = vmatprep.subr.mxu0 0.0
    %224 = vmatpush2.msra.mxu0 %v50
    %225 = vmatprep.subr.mxu0 0.0
    %226 = vmatpush2.msra.mxu0 %v49
    %227 = vmatprep.subr.mxu0 0.0
    %228 = vmatpush2.msra.mxu0 %v48
    %229 = vmatprep.subr.mxu0 0.0
    %230 = vmatpush2.msra.mxu0 %v47
    %231 = vmatprep.mubr.f32.mxu0 %v151
    %232 = vmatmul.mubr.f32.gmra.mxu0 %v143
    %v233 = vpop.f32.mrf.mxu0
    %v234 = vadd.f32 %v132, %v233
    %v235 = vpop.f32.mrf.mxu0
    %236 = vdwg.mxu0
    %237 = vmatprep.subr.mxu0 0.0
    %238 = vmatpush1.msra.mxu0 %v78
    %239 = vmatprep.subr.mxu0 0.0
    %240 = vmatpush1.msra.mxu0 %v77
    %241 = vmatprep.subr.mxu0 0.0
    %242 = vmatpush1.msra.mxu0 %v76
    %243 = vmatprep.subr.mxu0 0.0
    %244 = vmatpush1.msra.mxu0 %v75
    %245 = vmatprep.subr.mxu0 0.0
    %246 = vmatpush1.msra.mxu0 %v74
    %247 = vmatprep.subr.mxu0 0.0
    %248 = vmatpush1.msra.mxu0 %v73
    %249 = vmatprep.subr.mxu0 0.0
    %250 = vmatpush1.msra.mxu0 %v72
    %251 = vmatprep.subr.mxu0 0.0
    %252 = vmatpush1.msra.mxu0 %v71
    %253 = vmatprep.subr.mxu0 0.0
    %254 = vmatpush1.msra.mxu0 %v70
    %255 = vmatprep.subr.mxu0 0.0
    %256 = vmatpush1.msra.mxu0 %v69
    %257 = vmatprep.subr.mxu0 0.0
    %258 = vmatpush1.msra.mxu0 %v68
    %259 = vmatprep.subr.mxu0 0.0
    %260 = vmatpush1.msra.mxu0 %v67
    %261 = vmatprep.subr.mxu0 0.0
    %262 = vmatpush1.msra.mxu0 %v66
    %263 = vmatprep.subr.mxu0 0.0
    %264 = vmatpush1.msra.mxu0 %v65
    %265 = vmatprep.subr.mxu0 0.0
    %266 = vmatpush1.msra.mxu0 %v64
    %267 = vmatprep.subr.mxu0 0.0
    %268 = vmatpush1.msra.mxu0 %v63
    %269 = vmatprep.subr.mxu0 0.0
    %270 = vmatpush2.msra.mxu0 %v94
    %271 = vmatprep.subr.mxu0 0.0
    %272 = vmatpush2.msra.mxu0 %v93
    %273 = vmatprep.subr.mxu0 0.0
    %274 = vmatpush2.msra.mxu0 %v92
    %275 = vmatprep.subr.mxu0 0.0
    %276 = vmatpush2.msra.mxu0 %v91
    %277 = vmatprep.subr.mxu0 0.0
    %278 = vmatpush2.msra.mxu0 %v90
    %279 = vmatprep.subr.mxu0 0.0
    %280 = vmatpush2.msra.mxu0 %v89
    %281 = vmatprep.subr.mxu0 0.0
    %282 = vmatpush2.msra.mxu0 %v88
    %283 = vmatprep.subr.mxu0 0.0
    %284 = vmatpush2.msra.mxu0 %v87
    %285 = vmatprep.subr.mxu0 0.0
    %286 = vmatpush2.msra.mxu0 %v86
    %287 = vmatprep.subr.mxu0 0.0
    %288 = vmatpush2.msra.mxu0 %v85
    %289 = vmatprep.subr.mxu0 0.0
    %290 = vmatpush2.msra.mxu0 %v84
    %291 = vmatprep.subr.mxu0 0.0
    %292 = vmatpush2.msra.mxu0 %v83
    %293 = vmatprep.subr.mxu0 0.0
    %294 = vmatpush2.msra.mxu0 %v82
    %295 = vmatprep.subr.mxu0 0.0
    %296 = vmatpush2.msra.mxu0 %v81
    %297 = vmatprep.subr.mxu0 0.0
    %298 = vmatpush2.msra.mxu0 %v80
    %299 = vmatprep.subr.mxu0 0.0
    %300 = vmatpush2.msra.mxu0 %v79
    %301 = vmatprep.mubr.f32.mxu0 %v152
    %302 = vmatmul.mubr.f32.gmra.mxu0 %v150
    %v303 = vpop.f32.mrf.mxu0
    %v304 = vadd.f32 %v234, %v303
    %v305 = vpop.f32.mrf.mxu0
    %306 = vdwg.mxu0
    %307 = vmatprep.subr.mxu0 0.0
    %308 = vmatpush1.msra.mxu0 %v110
    %309 = vmatprep.subr.mxu0 0.0
    %310 = vmatpush1.msra.mxu0 %v109
    %311 = vmatprep.subr.mxu0 0.0
    %312 = vmatpush1.msra.mxu0 %v108
    %313 = vmatprep.subr.mxu0 0.0
    %314 = vmatpush1.msra.mxu0 %v107
    %315 = vmatprep.subr.mxu0 0.0
    %316 = vmatpush1.msra.mxu0 %v106
    %317 = vmatprep.subr.mxu0 0.0
    %318 = vmatpush1.msra.mxu0 %v105
    %319 = vmatprep.subr.mxu0 0.0
    %320 = vmatpush1.msra.mxu0 %v104
    %321 = vmatprep.subr.mxu0 0.0
    %322 = vmatpush1.msra.mxu0 %v103
    %323 = vmatprep.subr.mxu0 0.0
    %324 = vmatpush1.msra.mxu0 %v102
    %325 = vmatprep.subr.mxu0 0.0
    %326 = vmatpush1.msra.mxu0 %v101
    %327 = vmatprep.subr.mxu0 0.0
    %328 = vmatpush1.msra.mxu0 %v100
    %329 = vmatprep.subr.mxu0 0.0
    %330 = vmatpush1.msra.mxu0 %v99
    %331 = vmatprep.subr.mxu0 0.0
    %332 = vmatpush1.msra.mxu0 %v98
    %333 = vmatprep.subr.mxu0 0.0
    %334 = vmatpush1.msra.mxu0 %v97
    %335 = vmatprep.subr.mxu0 0.0
    %336 = vmatpush1.msra.mxu0 %v96
    %337 = vmatprep.subr.mxu0 0.0
    %338 = vmatpush1.msra.mxu0 %v95
    %339 = vmatprep.subr.mxu0 0.0
    %340 = vmatpush2.msra.mxu0 %v126
    %341 = vmatprep.subr.mxu0 0.0
    %342 = vmatpush2.msra.mxu0 %v125
    %343 = vmatprep.subr.mxu0 0.0
    %344 = vmatpush2.msra.mxu0 %v124
    %345 = vmatprep.subr.mxu0 0.0
    %346 = vmatpush2.msra.mxu0 %v123
    %347 = vmatprep.subr.mxu0 0.0
    %348 = vmatpush2.msra.mxu0 %v122
    %349 = vmatprep.subr.mxu0 0.0
    %350 = vmatpush2.msra.mxu0 %v121
    %351 = vmatprep.subr.mxu0 0.0
    %352 = vmatpush2.msra.mxu0 %v120
    %353 = vmatprep.subr.mxu0 0.0
    %354 = vmatpush2.msra.mxu0 %v119
    %355 = vmatprep.subr.mxu0 0.0
    %356 = vmatpush2.msra.mxu0 %v118
    %357 = vmatprep.subr.mxu0 0.0
    %358 = vmatpush2.msra.mxu0 %v117
    %359 = vmatprep.subr.mxu0 0.0
    %360 = vmatpush2.msra.mxu0 %v116
    %361 = vmatprep.subr.mxu0 0.0
    %362 = vmatpush2.msra.mxu0 %v115
    %363 = vmatprep.subr.mxu0 0.0
    %364 = vmatpush2.msra.mxu0 %v114
    %365 = vmatprep.subr.mxu0 0.0
    %366 = vmatpush2.msra.mxu0 %v113
    %367 = vmatprep.subr.mxu0 0.0
    %368 = vmatpush2.msra.mxu0 %v112
    %369 = vmatprep.subr.mxu0 0.0
    %370 = vmatpush2.msra.mxu0 %v111
    %371 = vmatprep.mubr.f32.mxu0 %v160
    %372 = vmatmul.mubr.f32.gmra.mxu0 %v159
    %v373 = vpop.f32.mrf.mxu0
    %v374 = vadd.f32 %v304, %v373
    %v375 = vpop.f32.mrf.mxu0
    %376 = vdwg.mxu0
    %vm377 = vcmask 1041408
    %v378 = vsel %vm377, %v374, -inf
    %379 = vmax.xlane.f32.xlu0 %v378
    %v380 = vpop.xlane.xlu0 %379
    %v381 = vsub.f32 %v374, %v380
    %v382 = vmul.f32 %v381, 1.442695
    %v383 = vpow.pop %v382
    %v384 = vsel %vm377, %v383, 0.0
    %385 = vadd.xlane.f32.xlu0 %v384
    %v386 = vpop.xlane.xlu0 %385
    %v387 = vrcp.pop %v386
    %v388 = vmul.f32 %v383, %v387
    %389 = vst [vmem:[#allocation5] sm:$0x3] %v388
    // Predicated region
    $region18: #{forward.1} parent=1 // pred_check
      _
    $region19: #{forward.1} parent=1 // pred_check_branch
      %391 = sbr.rel (0) target = $region21
    $region20: #{forward.1} parent=1 // pred_region
      %s393 = ssub.s32 32, 32
      %394 = vsyncadd [#allocation4], %s393
      %s396 = sshll.u32 [#allocation5], 4
      %s397 = int_to_ptr.vmem [resolvable:$true] %s396
      %399 = dma.vmem_to_hbm [thread:$0]  %s397, 32, %s3, [#allocation4]
    $region21: #{forward.1} parent=1 // pred_fallthru
      _
    // Predicated region
    $region22: #{forward.1} parent=1 // pred_check
      _
    $region23: #{forward.1} parent=1 // pred_check_branch
      %401 = sbr.rel (0) target = $region25
    $region24: #{forward.1} parent=1 // pred_region
      %402 = dma.done [#allocation4], 32
    $region25: #{forward.1} parent=1 // pred_fallthru
      _
    %403 = vsyncpa [#allocation3], 1
    %404 = vsyncpa [#allocation4], 1

</llo_original>
